<compile_context>
chip_gen: v7x
topology: tpu7x:2x2x1
jax: 0.10.0
libtpu: 0.0.40
codegen_flags: <defaults>
</compile_context>

<pallas_src>
import jax
import jax.numpy as jnp
from jax.experimental import pallas as pl
from jax.experimental.pallas import tpu as pltpu

D_IN = 64
D_HID = 64
D_OUT = 1


def _cdiv(a, b):
    return (a + b - 1) // b


def _round_up(x, m):
    return ((x + m - 1) // m) * m


def _device_kind():
    try:
        return jax.devices()[0].device_kind.lower()
    except Exception:
        return ""


def _default_epilogue_dtype():
    # bf16-native VPUs (v6e / v7x) -> bf16 bias+ReLU epilogue; otherwise f32.
    kind = _device_kind()
    if ("v6" in kind) or ("v7" in kind):
        return jnp.bfloat16
    return jnp.float32


def _tensorcores_per_chip():
    # Parts with 2 TensorCores sharing one device (grid is sharded across them).
    kind = _device_kind()
    if ("v7" in kind) or ("v4" in kind) or ("v5p" in kind):
        return 2
    return 1


def _dnsmos_mlp_kernel(x_ref, w1_ref, b1_ref, w2_ref, b2_ref, w3_ref, b3_ref,
                       o_ref):
    """Fused 3-layer MLP on one (tm, 64) row tile -> lane-dense (1, 1, tm)."""
    tm = x_ref.shape[0]
    cdt = w1_ref.dtype          # MXU operand dtype (bf16 from prepare_params)
    edt = b1_ref.dtype          # epilogue dtype (bf16 on v6e/v7x, f32 on v5e)

    x = x_ref[...]
    if x.dtype != cdt:
        x = x.astype(cdt)

    # Layers 1 & 2: MXU matmuls; bias + ReLU on the VPU in the epilogue dtype.
    h = jnp.dot(x, w1_ref[...], preferred_element_type=edt)          # (tm, 64)
    h = jnp.maximum(h + b1_ref[...], 0)
    if h.dtype != cdt:
        h = h.astype(cdt)
    h = jnp.dot(h, w2_ref[...], preferred_element_type=edt)          # (tm, 64)
    h = jnp.maximum(h + b2_ref[...], 0)
    if h.dtype != cdt:
        h = h.astype(cdt)

    # Layer 3 (64 -> 1), lane-dense: contract w3 (1,64) with h (tm,64) on the
    # feature dim (q @ k^T pattern), so the row index lands on the lane axis.
    # f32 accumulation, f32 bias add.
    w3 = w3_ref[...]
    if w3.dtype != h.dtype:
        w3 = w3.astype(h.dtype)
    y = jnp.einsum("xd,kd->xk", w3, h,
                   preferred_element_type=jnp.float32)               # (1, tm)
    y = y + b3_ref[...]                                              # (1,1)
    o_ref[...] = y.reshape(1, 1, tm).astype(o_ref.dtype)


def _pick_tile_rows(n_rows, tm_req, n_cores):
    """Largest-possible, near-balanced row tile (multiple of 128)."""
    tm_max = max(128, min(_round_up(tm_req, 128), _round_up(n_rows, 128)))
    n_tiles = _cdiv(n_rows, tm_max)
    if n_tiles <= 1:
        return tm_max
    if n_cores > 1 and n_tiles % n_cores:
        n_tiles += n_cores - (n_tiles % n_cores)     # even split across TCs
    return _round_up(_cdiv(n_rows, n_tiles), 128)


def dnsmos_head_pallas(embeddings, params, *, tm=8192, x_buffers=None):
    """embeddings: (..., 64) f32/bf16 array. params: output of prepare_params().
    Returns (..., 1) float32."""
    w1, b1, w2, b2, w3, b3 = params
    lead_shape = embeddings.shape[:-1]
    x = embeddings.reshape(-1, D_IN)           # contiguous reshape, no copy
    m_rows = x.shape[0]

    tm = _pick_tile_rows(m_rows, tm, _tensorcores_per_chip())
    n_tiles = _cdiv(m_rows, tm)

    if x_buffers is not None and x_buffers > 2:
        # Optional deeper input pipelining (sweep on v5e if input DMA exposed).
        x_spec = pl.BlockSpec((tm, D_IN), lambda i: (i, 0),
                              pipeline_mode=pl.Buffered(x_buffers))
    else:
        x_spec = pl.BlockSpec((tm, D_IN), lambda i: (i, 0))

    out = pl.pallas_call(
        _dnsmos_mlp_kernel,
        # Lane-dense output slab: one contiguous (1, tm) row per tile.
        out_shape=jax.ShapeDtypeStruct((n_tiles, 1, tm), jnp.float32),
        grid_spec=pltpu.PrefetchScalarGridSpec(
            num_scalar_prefetch=0,
            grid=(n_tiles,),
            in_specs=[
                x_spec,                                          # x row tile
                pl.BlockSpec((D_IN, D_HID), lambda i: (0, 0)),   # w1 (resident)
                pl.BlockSpec((1, D_HID), lambda i: (0, 0)),      # b1
                pl.BlockSpec((D_HID, D_HID), lambda i: (0, 0)),  # w2 (resident)
                pl.BlockSpec((1, D_HID), lambda i: (0, 0)),      # b2
                pl.BlockSpec((1, D_HID), lambda i: (0, 0)),      # w3 row (1,64)
                pl.BlockSpec((1, D_OUT), lambda i: (0, 0)),      # b3 (1,1)
            ],
            out_specs=pl.BlockSpec((1, 1, tm), lambda i: (i, 0, 0)),
        ),
        compiler_params=pltpu.CompilerParams(
            dimension_semantics=("parallel",),      # shard row tiles across TCs
            vmem_limit_bytes=48 * 1024 * 1024,      # explicit budget (v7x-safe)
        ),
    )(x, w1, b1, w2, b2, w3, b3)

    flat = out.reshape(-1)                     # index g*tm + c == output row
    if flat.shape[0] != m_rows:
        flat = flat[:m_rows]                   # drop the ragged-tail padding
    return flat.reshape(*lead_shape, D_OUT)


def init_params(key):
    """Synthetic weights in PyTorch nn.Linear (out, in) convention."""
    k1, k2, k3, k4, k5, k6 = jax.random.split(key, 6)
    w1 = jax.random.normal(k1, (D_HID, D_IN), jnp.float32) * 0.1
    b1 = jax.random.normal(k2, (D_HID,), jnp.float32) * 0.1
    w2 = jax.random.normal(k3, (D_HID, D_HID), jnp.float32) * 0.1
    b2 = jax.random.normal(k4, (D_HID,), jnp.float32) * 0.1
    w3 = jax.random.normal(k5, (D_OUT, D_HID), jnp.float32) * 0.1
    b3 = jax.random.normal(k6, (D_OUT,), jnp.float32) * 0.1
    return (w1, b1, w2, b2, w3, b3)


def prepare_params(torch_params, *, epilogue_dtype=None):
    """One-time param prep (keeps the call path free of per-call casts):
    w1/w2 transposed to (in, out) and cast to bf16 for the MXU; biases
    reshaped to rows in the epilogue dtype; w3 kept as a bf16 (1, 64) row;
    b3 stays f32 for the final accumulation."""
    w1, b1, w2, b2, w3, b3 = torch_params
    edt = _default_epilogue_dtype() if epilogue_dtype is None else epilogue_dtype
    return (
        jnp.asarray(w1).T.astype(jnp.bfloat16),
        jnp.asarray(b1).reshape(1, D_HID).astype(edt),
        jnp.asarray(w2).T.astype(jnp.bfloat16),
        jnp.asarray(b2).reshape(1, D_HID).astype(edt),
        jnp.asarray(w3).reshape(1, D_HID).astype(jnp.bfloat16),
        jnp.asarray(b3).reshape(1, D_OUT).astype(jnp.float32),
    )


def dnsmos_head_ref(embeddings, torch_params):
    """Pure-JAX f32 reference of the PyTorch module (w in (out, in) layout)."""
    w1, b1, w2, b2, w3, b3 = torch_params
    x = embeddings.astype(jnp.float32)
    h = jnp.maximum(x @ w1.T + b1, 0.0)
    h = jnp.maximum(h @ w2.T + b2, 0.0)
    return h @ w3.T + b3


if __name__ == "__main__":
    key = jax.random.PRNGKey(0)
    k_x, k_x2, k_p = jax.random.split(key, 3)
    torch_params = init_params(k_p)
    params = prepare_params(torch_params)          # one-time prep

    # Small shape matching the module's expected embeddings layout.
    batch, seq = 2, 8
    emb = jax.random.normal(k_x, (batch, seq, D_IN), jnp.float32)
    pred = jax.block_until_ready(dnsmos_head_pallas(emb, params))
    ref = dnsmos_head_ref(emb, torch_params)
    assert pred.shape == (batch, seq, 1), pred.shape
    # bf16 MXU operands (and bf16 epilogue on v6e/v7x) -> bf16-level tolerance.
    assert jnp.allclose(pred, ref, atol=5e-2, rtol=5e-2), \
        float(jnp.max(jnp.abs(pred - ref)))

    # Moderate shape: ragged (non-multiple-of-128) row count, single big tile.
    emb2 = jax.random.normal(k_x2, (4, 520, D_IN), jnp.float32)   # M = 2080
    pred2 = jax.block_until_ready(dnsmos_head_pallas(emb2, params))
    ref2 = dnsmos_head_ref(emb2, torch_params)
    assert pred2.shape == (4, 520, 1), pred2.shape
    assert jnp.allclose(pred2, ref2, atol=5e-2, rtol=5e-2), \
        float(jnp.max(jnp.abs(pred2 - ref2)))

    # Multi-tile path: exercises the balanced grid + ragged final tile.
    pred3 = jax.block_until_ready(dnsmos_head_pallas(emb2, params, tm=512))
    assert jnp.allclose(pred3, ref2, atol=5e-2, rtol=5e-2), \
        float(jnp.max(jnp.abs(pred3 - ref2)))

    # bf16 embeddings accepted directly (halves the HBM-read-bound input
    # traffic); extra slack for input quantization.
    pred4 = jax.block_until_ready(
        dnsmos_head_pallas(emb2.astype(jnp.bfloat16), params))
    assert jnp.allclose(pred4, ref2, atol=1e-1, rtol=1e-1), \
        float(jnp.max(jnp.abs(pred4 - ref2)))

    print("KERNEL_OK")
</pallas_src>

<mosaic_0001>
module attributes {stable_mosaic.version = 11 : i64} {
  func.func @_dnsmos_mlp_kernel(%arg0: i32, %arg1: memref<128x64xf32, #tpu.memory_space<vmem>>, %arg2: memref<64x64xbf16, #tpu.memory_space<vmem>>, %arg3: memref<1x64xf32, #tpu.memory_space<vmem>>, %arg4: memref<64x64xbf16, #tpu.memory_space<vmem>>, %arg5: memref<1x64xf32, #tpu.memory_space<vmem>>, %arg6: memref<1x64xbf16, #tpu.memory_space<vmem>>, %arg7: memref<1x1xf32, #tpu.memory_space<vmem>>, %arg8: memref<1x1x128xf32, #tpu.memory_space<vmem>>) attributes {dimension_semantics = [#tpu.dimension_semantics<parallel>], iteration_bounds = array<i64: 1>, scalar_prefetch = 0 : i64, scratch_operands = 0 : i64, tpu.core_type = #tpu.core_type<tc>, window_params = [{transform_indices = @transform_0, window_bounds = array<i64: 128, 64>}, {pipeline_mode = #tpu.pipeline_mode<synchronous>, transform_indices = @transform_1, window_bounds = array<i64: 64, 64>}, {pipeline_mode = #tpu.pipeline_mode<synchronous>, transform_indices = @transform_2, window_bounds = array<i64: 1, 64>}, {pipeline_mode = #tpu.pipeline_mode<synchronous>, transform_indices = @transform_3, window_bounds = array<i64: 64, 64>}, {pipeline_mode = #tpu.pipeline_mode<synchronous>, transform_indices = @transform_4, window_bounds = array<i64: 1, 64>}, {pipeline_mode = #tpu.pipeline_mode<synchronous>, transform_indices = @transform_5, window_bounds = array<i64: 1, 64>}, {pipeline_mode = #tpu.pipeline_mode<synchronous>, transform_indices = @transform_6, window_bounds = array<i64: 1, 1>}, {transform_indices = @transform_7, window_bounds = array<i64: 1, 1, 128>}]} {
    %c0 = arith.constant 0 : index
    %c0_0 = arith.constant 0 : index
    %0 = vector.load %arg1[%c0, %c0_0] : memref<128x64xf32, #tpu.memory_space<vmem>>, vector<128x64xf32>
    %1 = arith.truncf %0 : vector<128x64xf32> to vector<128x64xbf16>
    %c0_1 = arith.constant 0 : index
    %c0_2 = arith.constant 0 : index
    %2 = vector.load %arg2[%c0_1, %c0_2] : memref<64x64xbf16, #tpu.memory_space<vmem>>, vector<64x64xbf16>
    %cst = arith.constant dense<0.000000e+00> : vector<128x64xf32>
    %3 = tpu.matmul %1, %2, %cst {dimension_numbers = #tpu.dot_dimension_numbers<[1], [0], [0], [1], [0, 0, 1, 1], [], []>} : vector<128x64xbf16>, vector<64x64xbf16>, vector<128x64xf32> -> vector<128x64xf32>
    %c0_3 = arith.constant 0 : index
    %c0_4 = arith.constant 0 : index
    %4 = vector.load %arg3[%c0_3, %c0_4] : memref<1x64xf32, #tpu.memory_space<vmem>>, vector<1x64xf32>
    %5 = vector.broadcast %4 : vector<1x64xf32> to vector<128x64xf32>
    %6 = arith.addf %3, %5 : vector<128x64xf32>
    %cst_5 = arith.constant 0.000000e+00 : f32
    %7 = vector.broadcast %cst_5 : f32 to vector<128x64xf32>
    %8 = arith.maximumf %6, %7 : vector<128x64xf32>
    %9 = arith.truncf %8 : vector<128x64xf32> to vector<128x64xbf16>
    %c0_6 = arith.constant 0 : index
    %c0_7 = arith.constant 0 : index
    %10 = vector.load %arg4[%c0_6, %c0_7] : memref<64x64xbf16, #tpu.memory_space<vmem>>, vector<64x64xbf16>
    %cst_8 = arith.constant dense<0.000000e+00> : vector<128x64xf32>
    %11 = tpu.matmul %9, %10, %cst_8 {dimension_numbers = #tpu.dot_dimension_numbers<[1], [0], [0], [1], [0, 0, 1, 1], [], []>} : vector<128x64xbf16>, vector<64x64xbf16>, vector<128x64xf32> -> vector<128x64xf32>
    %c0_9 = arith.constant 0 : index
    %c0_10 = arith.constant 0 : index
    %12 = vector.load %arg5[%c0_9, %c0_10] : memref<1x64xf32, #tpu.memory_space<vmem>>, vector<1x64xf32>
    %13 = vector.broadcast %12 : vector<1x64xf32> to vector<128x64xf32>
    %14 = arith.addf %11, %13 : vector<128x64xf32>
    %cst_11 = arith.constant 0.000000e+00 : f32
    %15 = vector.broadcast %cst_11 : f32 to vector<128x64xf32>
    %16 = arith.maximumf %14, %15 : vector<128x64xf32>
    %17 = arith.truncf %16 : vector<128x64xf32> to vector<128x64xbf16>
    %c0_12 = arith.constant 0 : index
    %c0_13 = arith.constant 0 : index
    %18 = vector.load %arg6[%c0_12, %c0_13] : memref<1x64xbf16, #tpu.memory_space<vmem>>, vector<1x64xbf16>
    "tpu.trace_start"() <{level = 10 : i32, message = "xd,kd->xk"}> : () -> ()
    %cst_14 = arith.constant dense<0.000000e+00> : vector<1x128xf32>
    %19 = tpu.matmul %18, %17, %cst_14 {dimension_numbers = #tpu.dot_dimension_numbers<[1], [1], [0], [0], [0, 0, 1, 0], [], []>} : vector<1x64xbf16>, vector<128x64xbf16>, vector<1x128xf32> -> vector<1x128xf32>
    "tpu.trace_stop"() : () -> ()
    %c0_15 = arith.constant 0 : index
    %c0_16 = arith.constant 0 : index
    %20 = vector.load %arg7[%c0_15, %c0_16] : memref<1x1xf32, #tpu.memory_space<vmem>>, vector<1x1xf32>
    %21 = vector.broadcast %20 : vector<1x1xf32> to vector<1x128xf32>
    %22 = arith.addf %19, %21 : vector<1x128xf32>
    %23 = vector.shape_cast %22 : vector<1x128xf32> to vector<1x1x128xf32>
    %c0_17 = arith.constant 0 : index
    %c0_18 = arith.constant 0 : index
    %c0_19 = arith.constant 0 : index
    %24 = vector.load %arg8[%c0_17, %c0_18, %c0_19] : memref<1x1x128xf32, #tpu.memory_space<vmem>>, vector<1x1x128xf32>
    tpu.vector_store %arg8[%c0_17, %c0_18, %c0_19], %23 {strides = array<i32>} : memref<1x1x128xf32, #tpu.memory_space<vmem>>, vector<1x1x128xf32>,
    return
  }
  func.func @transform_0(%arg0: i32) -> (i32, i32) {
    %c0_i32 = arith.constant 0 : i32
    %c0_i32_0 = arith.constant 0 : i32
    return %arg0, %c0_i32 : i32, i32
  }
  func.func @transform_1(%arg0: i32) -> (i32, i32) {
    %c0_i32 = arith.constant 0 : i32
    %c0_i32_0 = arith.constant 0 : i32
    %c0_i32_1 = arith.constant 0 : i32
    return %c0_i32, %c0_i32_0 : i32, i32
  }
  func.func @transform_2(%arg0: i32) -> (i32, i32) {
    %c0_i32 = arith.constant 0 : i32
    %c0_i32_0 = arith.constant 0 : i32
    %c0_i32_1 = arith.constant 0 : i32
    return %c0_i32, %c0_i32_0 : i32, i32
  }
  func.func @transform_3(%arg0: i32) -> (i32, i32) {
    %c0_i32 = arith.constant 0 : i32
    %c0_i32_0 = arith.constant 0 : i32
    %c0_i32_1 = arith.constant 0 : i32
    return %c0_i32, %c0_i32_0 : i32, i32
  }
  func.func @transform_4(%arg0: i32) -> (i32, i32) {
    %c0_i32 = arith.constant 0 : i32
    %c0_i32_0 = arith.constant 0 : i32
    %c0_i32_1 = arith.constant 0 : i32
    return %c0_i32, %c0_i32_0 : i32, i32
  }
  func.func @transform_5(%arg0: i32) -> (i32, i32) {
    %c0_i32 = arith.constant 0 : i32
    %c0_i32_0 = arith.constant 0 : i32
    %c0_i32_1 = arith.constant 0 : i32
    return %c0_i32, %c0_i32_0 : i32, i32
  }
  func.func @transform_6(%arg0: i32) -> (i32, i32) {
    %c0_i32 = arith.constant 0 : i32
    %c0_i32_0 = arith.constant 0 : i32
    %c0_i32_1 = arith.constant 0 : i32
    return %c0_i32, %c0_i32_0 : i32, i32
  }
  func.func @transform_7(%arg0: i32) -> (i32, i32, i32) {
    %c0_i32 = arith.constant 0 : i32
    %c0_i32_0 = arith.constant 0 : i32
    %c0_i32_1 = arith.constant 0 : i32
    return %arg0, %c0_i32, %c0_i32_0 : i32, i32, i32
  }
}

</mosaic_0001>

<llo_original>
// kernel: tpu_custom_call.1
$region0: #{tpu_custom_call.1}
  #allocation0 [shape = 'u32[]', space=smem, size = 0x4, offset = 0x4, fixed_abs, tag = 'smem constant byte address 0x4 - core index']
  #allocation1 [shape = 'u32[144,128]{1,0:T(1,128)}', space=vmem, size = 0x12000, scoped, tag = 'internal scratch']
  #allocation2 [shape = 'f32[1,1]{1,0:T(1,128)S(1)}', space=vmem, size = 0x200, scoped, tag = 'scoped memory for tpu_custom_call.1']
  %s0 = inlined_call_operand.hbm [shape: f32[16,64], index: 0, kind: input, shape index: {}]
  %s1 = inlined_call_operand.hbm [shape: bf16[64,64], index: 1, kind: input, shape index: {}]
  %s2 = inlined_call_operand.vmem [shape: f32[1,64], index: 2, kind: input, shape index: {}]
  %s3 = inlined_call_operand.hbm [shape: bf16[64,64], index: 3, kind: input, shape index: {}]
  %s4 = inlined_call_operand.vmem [shape: f32[1,64], index: 4, kind: input, shape index: {}]
  %s5 = inlined_call_operand.vmem [shape: bf16[1,64], index: 5, kind: input, shape index: {}]
  %s6 = inlined_call_operand.<no memory space> [shape: f32[1,1], index: 6, kind: input, shape index: {}]
  %s7 = inlined_call_operand.hbm [shape: f32[1,1,128], index: 7, kind: output, shape index: {}]
  %s8 = sld [smem:[#allocation0]]
  $region50: #{tpu_custom_call.1} parent=0
    _
  %s10 = ssub.s32 1, %s8
  %s11 = scalar_select 0, %s10, %s8
  %v12 = vstv %s6
  %13 = vst [vmem:[#allocation2] sm:$0x1] %v12
  $region1: #{tpu_custom_call.1} parent=0
    #allocation3 [shape = 'u8[65536]{0}', space=vmem, size = 0x10000, scoped, tag = 'input window, operand 0, single buffered']
    #allocation4 [shape = 's32[1]{0}', space=sflag, size = 0x4, scoped, tag = 'scoped memory for tpu_custom_call.1']
    #allocation5 [shape = 's32[1]{0}', space=sflag, size = 0x4, scoped, tag = 'scoped memory for tpu_custom_call.1']
    #allocation6 [shape = 'u8[16384]{0}', space=vmem, size = 0x4000, scoped, tag = 'input window, operand 1, single buffered']
    #allocation7 [shape = 's32[1]{0}', space=sflag, size = 0x4, scoped, tag = 'scoped memory for tpu_custom_call.1']
    #allocation8 [shape = 'u8[16384]{0}', space=vmem, size = 0x4000, scoped, tag = 'input window, operand 3, single buffered']
    #allocation9 [shape = 'u8[512]{0}', space=vmem, size = 0x400, scoped, tag = 'output window, operand 0, single buffered']
    %14 = vsyncpa [#allocation4], 0
    %15 = vsyncpa [#allocation7], 0
    %16 = vsyncpa [#allocation5], 0
    // Predicated region
    $region2: #{tpu_custom_call.1} parent=1 // pred_check
      _
    $region3: #{tpu_custom_call.1} parent=1 // pred_check_branch
      %18 = sbr.rel (0) target = $region5
    $region4: #{tpu_custom_call.1} parent=1 // pred_region
      %s20 = ssub.s32 2048, 256
      %21 = vsyncadd [#allocation4], %s20
      %s22 = sshll.u32 [#allocation3], 4
      %s23 = int_to_ptr.vmem [resolvable:$true] %s22
      %28 = dma.hbm_to_vmem [thread:$0]  %s0, 256, %s23, [#allocation4], 128, 128, 8
    $region5: #{tpu_custom_call.1} parent=1 // pred_fallthru
      _
    // Predicated region
    $region6: #{tpu_custom_call.1} parent=1 // pred_check
      _
    $region7: #{tpu_custom_call.1} parent=1 // pred_check_branch
      %30 = sbr.rel (0) target = $region9
    $region8: #{tpu_custom_call.1} parent=1 // pred_region
      %s32 = ssub.s32 512, 512
      %33 = vsyncadd [#allocation7], %s32
      %s34 = sshll.u32 [#allocation6], 4
      %s35 = int_to_ptr.vmem [resolvable:$true] %s34
      %40 = dma.hbm_to_vmem [thread:$0]  %s1, 512, %s35, [#allocation7], 64, 64, 4
    $region9: #{tpu_custom_call.1} parent=1 // pred_fallthru
      _
    // Predicated region
    $region10: #{tpu_custom_call.1} parent=1 // pred_check
      _
    $region11: #{tpu_custom_call.1} parent=1 // pred_check_branch
      %42 = sbr.rel (0) target = $region13
    $region12: #{tpu_custom_call.1} parent=1 // pred_region
      _
    $region13: #{tpu_custom_call.1} parent=1 // pred_fallthru
      _
    // Predicated region
    $region14: #{tpu_custom_call.1} parent=1 // pred_check
      _
    $region15: #{tpu_custom_call.1} parent=1 // pred_check_branch
      %44 = sbr.rel (0) target = $region17
    $region16: #{tpu_custom_call.1} parent=1 // pred_region
      %s46 = ssub.s32 512, 512
      %47 = vsyncadd [#allocation7], %s46
      %s48 = sshll.u32 [#allocation8], 4
      %s49 = int_to_ptr.vmem [resolvable:$true] %s48
      %54 = dma.hbm_to_vmem [thread:$0]  %s3, 512, %s49, [#allocation7], 64, 64, 4
    $region17: #{tpu_custom_call.1} parent=1 // pred_fallthru
      _
    // Predicated region
    $region18: #{tpu_custom_call.1} parent=1 // pred_check
      _
    $region19: #{tpu_custom_call.1} parent=1 // pred_check_branch
      %56 = sbr.rel (0) target = $region21
    $region20: #{tpu_custom_call.1} parent=1 // pred_region
      _
    $region21: #{tpu_custom_call.1} parent=1 // pred_fallthru
      _
    // Predicated region
    $region22: #{tpu_custom_call.1} parent=1 // pred_check
      _
    $region23: #{tpu_custom_call.1} parent=1 // pred_check_branch
      %58 = sbr.rel (0) target = $region25
    $region24: #{tpu_custom_call.1} parent=1 // pred_region
      _
    $region25: #{tpu_custom_call.1} parent=1 // pred_fallthru
      _
    // Predicated region
    $region26: #{tpu_custom_call.1} parent=1 // pred_check
      _
    $region27: #{tpu_custom_call.1} parent=1 // pred_check_branch
      %60 = sbr.rel (0) target = $region29
    $region28: #{tpu_custom_call.1} parent=1 // pred_region
      _
    $region29: #{tpu_custom_call.1} parent=1 // pred_fallthru
      _
    // Predicated region
    $region30: #{tpu_custom_call.1} parent=1 // pred_check
      _
    $region31: #{tpu_custom_call.1} parent=1 // pred_check_branch
      %62 = sbr.rel (0) target = $region33
    $region32: #{tpu_custom_call.1} parent=1 // pred_region
      %63 = dma.done [#allocation4], 2048
    $region33: #{tpu_custom_call.1} parent=1 // pred_fallthru
      _
    // Predicated region
    $region34: #{tpu_custom_call.1} parent=1 // pred_check
      _
    $region35: #{tpu_custom_call.1} parent=1 // pred_check_branch
      %65 = sbr.rel (0) target = $region37
    $region36: #{tpu_custom_call.1} parent=1 // pred_region
      %66 = dma.done [#allocation7], 512
    $region37: #{tpu_custom_call.1} parent=1 // pred_fallthru
      _
    // Predicated region
    $region38: #{tpu_custom_call.1} parent=1 // pred_check
      _
    $region39: #{tpu_custom_call.1} parent=1 // pred_check_branch
      %68 = sbr.rel (0) target = $region41
    $region40: #{tpu_custom_call.1} parent=1 // pred_region
      %69 = dma.done [#allocation7], 512
    $region41: #{tpu_custom_call.1} parent=1 // pred_fallthru
      _
    %v71 = vld [vmem:[#allocation3] sm:$0xff]
    %v72 = vld [vmem:[#allocation3 + $0x8] sm:$0xff]
    %v73 = vld [vmem:[#allocation3 + $0x10] sm:$0xff]
    %v74 = vld [vmem:[#allocation3 + $0x18] sm:$0xff]
    %v75 = vld [vmem:[#allocation3 + $0x20] sm:$0xff]
    %v76 = vld [vmem:[#allocation3 + $0x28] sm:$0xff]
    %v77 = vld [vmem:[#allocation3 + $0x30] sm:$0xff]
    %v78 = vld [vmem:[#allocation3 + $0x38] sm:$0xff]
    %v79 = vld [vmem:[#allocation3 + $0x40] sm:$0xff]
    %v80 = vld [vmem:[#allocation3 + $0x48] sm:$0xff]
    %v81 = vld [vmem:[#allocation3 + $0x50] sm:$0xff]
    %v82 = vld [vmem:[#allocation3 + $0x58] sm:$0xff]
    %v83 = vld [vmem:[#allocation3 + $0x60] sm:$0xff]
    %v84 = vld [vmem:[#allocation3 + $0x68] sm:$0xff]
    %v85 = vld [vmem:[#allocation3 + $0x70] sm:$0xff]
    %v86 = vld [vmem:[#allocation3 + $0x78] sm:$0xff]
    %v87 = vpack.c.bf16 %v72, %v71
    %v88 = vpack.c.bf16 %v74, %v73
    %v89 = vpack.c.bf16 %v76, %v75
    %v90 = vpack.c.bf16 %v78, %v77
    %v91 = vpack.c.bf16 %v80, %v79
    %v92 = vpack.c.bf16 %v82, %v81
    %v93 = vpack.c.bf16 %v84, %v83
    %v94 = vpack.c.bf16 %v86, %v85
    %v95 = vld [vmem:[#allocation6] sm:$0xf]
    %v96 = vld [vmem:[#allocation6 + $0x4] sm:$0xf]
    %v97 = vld [vmem:[#allocation6 + $0x8] sm:$0xf]
    %v98 = vld [vmem:[#allocation6 + $0xc] sm:$0xf]
    %v99 = vld [vmem:[#allocation6 + $0x10] sm:$0xf]
    %v100 = vld [vmem:[#allocation6 + $0x14] sm:$0xf]
    %v101 = vld [vmem:[#allocation6 + $0x18] sm:$0xf]
    %v102 = vld [vmem:[#allocation6 + $0x1c] sm:$0xf]
    %v103 = vld [vmem:[%s2] sm:$0x1]
    %v105 = vlaneseq
    %v106 = vshrl.u32 %v105, 7
    %v107 = vsub.s32 0, %v106
    %v108 = vrot.slane %v103, %v107
    %v118 = vunpack.c.l.b16 %v95
    %v119 = vunpack.c.l.b16 %v96
    %v120 = vunpack.c.l.b16 %v97
    %v121 = vunpack.c.l.b16 %v98
    %v122 = vunpack.c.l.b16 %v99
    %v123 = vunpack.c.l.b16 %v100
    %v124 = vunpack.c.l.b16 %v101
    %v125 = vunpack.c.l.b16 %v102
    %v126 = vpack.c.b16 %v119, %v118
    %v127 = vpack.c.b16 %v121, %v120
    %v128 = vpack.c.b16 %v123, %v122
    %v129 = vpack.c.b16 %v125, %v124
    %vm134 = vcmask 523264
    %v136 = vsel %vm134, %v87, 0
    %v139 = vsel %vm134, %v88, 0
    %v142 = vsel %vm134, %v89, 0
    %v145 = vsel %vm134, %v90, 0
    %v148 = vsel %vm134, %v91, 0
    %v151 = vsel %vm134, %v92, 0
    %v154 = vsel %vm134, %v93, 0
    %v157 = vsel %vm134, %v94, 0
    %159 = vmatprep.subr.bf16.mxu0 0
    %160 = vmatpush1.bf16.msra.mxu0 %v126
    %161 = vmatprep.subr.bf16.mxu0 0
    %162 = vmatpush1.bf16.msra.mxu0 %v127
    %163 = vmatprep.subr.bf16.mxu0 0
    %164 = vmatpush1.bf16.msra.mxu0 %v128
    %165 = vmatprep.subr.bf16.mxu0 0
    %166 = vmatpush1.bf16.msra.mxu0 %v129
    %167 = vmatprep.subr.bf16.mxu0 0
    %168 = vmatpush1.bf16.msra.mxu0 0
    %169 = vmatprep.subr.bf16.mxu0 0
    %170 = vmatpush1.bf16.msra.mxu0 0
    %171 = vmatprep.subr.bf16.mxu0 0
    %172 = vmatpush1.bf16.msra.mxu0 0
    %173 = vmatprep.subr.bf16.mxu0 0
    %174 = vmatpush1.bf16.msra.mxu0 0
    %175 = vmatprep.subr.bf16.mxu0 0
    %176 = vmatpush1.bf16.msra.mxu0 0
    %177 = vmatprep.subr.bf16.mxu0 0
    %178 = vmatpush1.bf16.msra.mxu0 0
    %179 = vmatprep.subr.bf16.mxu0 0
    %180 = vmatpush1.bf16.msra.mxu0 0
    %181 = vmatprep.subr.bf16.mxu0 0
    %182 = vmatpush1.bf16.msra.mxu0 0
    %183 = vmatprep.subr.bf16.mxu0 0
    %184 = vmatpush1.bf16.msra.mxu0 0
    %185 = vmatprep.subr.bf16.mxu0 0
    %186 = vmatpush1.bf16.msra.mxu0 0
    %187 = vmatprep.subr.bf16.mxu0 0
    %188 = vmatpush1.bf16.msra.mxu0 0
    %189 = vmatprep.subr.bf16.mxu0 0
    %190 = vmatpush1.bf16.msra.mxu0 0
    %191 = vmatprep.mubr.bf16.mxu0 0
    %192 = vmatmul.mubr.bf16.gmra.mrb[0].mxu0 %v136
    %v193 = vpop.f32.mrb[0].mxu0
    %v194 = vadd.f32 %v108, %v193
    %v195 = vpop.f32.mrb[0].mxu0
    %v196 = vpop.f32.mrb[0].mxu0
    %v197 = vadd.f32 %v108, %v196
    %v198 = vpop.f32.mrb[0].mxu0
    %199 = vmatprep.mubr.bf16.mxu0 0
    %200 = vmatmul.mubr.bf16.gmra.mrb[0].mxu0 %v139
    %v201 = vpop.f32.mrb[0].mxu0
    %v202 = vadd.f32 %v108, %v201
    %v203 = vpop.f32.mrb[0].mxu0
    %v204 = vpop.f32.mrb[0].mxu0
    %v205 = vadd.f32 %v108, %v204
    %v206 = vpop.f32.mrb[0].mxu0
    %207 = vmatprep.mubr.bf16.mxu0 0
    %208 = vmatmul.mubr.bf16.gmra.mrb[0].mxu0 %v142
    %v209 = vpop.f32.mrb[0].mxu0
    %v210 = vadd.f32 %v108, %v209
    %v211 = vpop.f32.mrb[0].mxu0
    %v212 = vpop.f32.mrb[0].mxu0
    %v213 = vadd.f32 %v108, %v212
    %v214 = vpop.f32.mrb[0].mxu0
    %215 = vmatprep.mubr.bf16.mxu0 0
    %216 = vmatmul.mubr.bf16.gmra.mrb[0].mxu0 %v145
    %v217 = vpop.f32.mrb[0].mxu0
    %v218 = vadd.f32 %v108, %v217
    %v219 = vpop.f32.mrb[0].mxu0
    %v220 = vpop.f32.mrb[0].mxu0
    %v221 = vadd.f32 %v108, %v220
    %v222 = vpop.f32.mrb[0].mxu0
    %223 = vmatprep.mubr.bf16.mxu0 0
    %224 = vmatmul.mubr.bf16.gmra.mrb[0].mxu0 %v148
    %v225 = vpop.f32.mrb[0].mxu0
    %v226 = vadd.f32 %v108, %v225
    %v227 = vpop.f32.mrb[0].mxu0
    %v228 = vpop.f32.mrb[0].mxu0
    %v229 = vadd.f32 %v108, %v228
    %v230 = vpop.f32.mrb[0].mxu0
    %231 = vmatprep.mubr.bf16.mxu0 0
    %232 = vmatmul.mubr.bf16.gmra.mrb[0].mxu0 %v151
    %v233 = vpop.f32.mrb[0].mxu0
    %v234 = vadd.f32 %v108, %v233
    %v235 = vpop.f32.mrb[0].mxu0
    %v236 = vpop.f32.mrb[0].mxu0
    %v237 = vadd.f32 %v108, %v236
    %v238 = vpop.f32.mrb[0].mxu0
    %239 = vmatprep.mubr.bf16.mxu0 0
    %240 = vmatmul.mubr.bf16.gmra.mrb[0].mxu0 %v154
    %v241 = vpop.f32.mrb[0].mxu0
    %v242 = vadd.f32 %v108, %v241
    %v243 = vpop.f32.mrb[0].mxu0
    %v244 = vpop.f32.mrb[0].mxu0
    %v245 = vadd.f32 %v108, %v244
    %v246 = vpop.f32.mrb[0].mxu0
    %247 = vmatprep.mubr.bf16.mxu0 0
    %248 = vmatmul.mubr.bf16.gmra.mrb[0].mxu0 %v157
    %v249 = vpop.f32.mrb[0].mxu0
    %v250 = vadd.f32 %v108, %v249
    %v251 = vpop.f32.mrb[0].mxu0
    %v252 = vpop.f32.mrb[0].mxu0
    %v253 = vadd.f32 %v108, %v252
    %v254 = vpop.f32.mrb[0].mxu0
    %255 = vdwg.mxu0
    %v256 = vmax.f32 %v194, 0.0
    %v257 = vmax.f32 %v197, 0.0
    %v258 = vmax.f32 %v202, 0.0
    %v259 = vmax.f32 %v205, 0.0
    %v260 = vmax.f32 %v210, 0.0
    %v261 = vmax.f32 %v213, 0.0
    %v262 = vmax.f32 %v218, 0.0
    %v263 = vmax.f32 %v221, 0.0
    %v264 = vmax.f32 %v226, 0.0
    %v265 = vmax.f32 %v229, 0.0
    %v266 = vmax.f32 %v234, 0.0
    %v267 = vmax.f32 %v237, 0.0
    %v268 = vmax.f32 %v242, 0.0
    %v269 = vmax.f32 %v245, 0.0
    %v270 = vmax.f32 %v250, 0.0
    %v271 = vmax.f32 %v253, 0.0
    %v272 = vpack.c.bf16 %v257, %v256
    %v273 = vpack.c.bf16 %v259, %v258
    %v274 = vpack.c.bf16 %v261, %v260
    %v275 = vpack.c.bf16 %v263, %v262
    %v276 = vpack.c.bf16 %v265, %v264
    %v277 = vpack.c.bf16 %v267, %v266
    %v278 = vpack.c.bf16 %v269, %v268
    %v279 = vpack.c.bf16 %v271, %v270
    %v280 = vld [vmem:[#allocation8] sm:$0xf]
    %v281 = vld [vmem:[#allocation8 + $0x4] sm:$0xf]
    %v282 = vld [vmem:[#allocation8 + $0x8] sm:$0xf]
    %v283 = vld [vmem:[#allocation8 + $0xc] sm:$0xf]
    %v284 = vld [vmem:[#allocation8 + $0x10] sm:$0xf]
    %v285 = vld [vmem:[#allocation8 + $0x14] sm:$0xf]
    %v286 = vld [vmem:[#allocation8 + $0x18] sm:$0xf]
    %v287 = vld [vmem:[#allocation8 + $0x1c] sm:$0xf]
    %v288 = vld [vmem:[%s4] sm:$0x1]
    %v290 = vlaneseq
    %v291 = vshrl.u32 %v290, 7
    %v292 = vsub.s32 0, %v291
    %v293 = vrot.slane %v288, %v292
    %v303 = vunpack.c.l.b16 %v280
    %v304 = vunpack.c.l.b16 %v281
    %v305 = vunpack.c.l.b16 %v282
    %v306 = vunpack.c.l.b16 %v283
    %v307 = vunpack.c.l.b16 %v284
    %v308 = vunpack.c.l.b16 %v285
    %v309 = vunpack.c.l.b16 %v286
    %v310 = vunpack.c.l.b16 %v287
    %v311 = vpack.c.b16 %v304, %v303
    %v312 = vpack.c.b16 %v306, %v305
    %v313 = vpack.c.b16 %v308, %v307
    %v314 = vpack.c.b16 %v310, %v309
    %v320 = vsel %vm134, %v272, 0
    %v323 = vsel %vm134, %v273, 0
    %v326 = vsel %vm134, %v274, 0
    %v329 = vsel %vm134, %v275, 0
    %v332 = vsel %vm134, %v276, 0
    %v335 = vsel %vm134, %v277, 0
    %v338 = vsel %vm134, %v278, 0
    %v341 = vsel %vm134, %v279, 0
    %343 = vmatprep.subr.bf16.mxu0 0
    %344 = vmatpush1.bf16.msra.mxu0 %v311
    %345 = vmatprep.subr.bf16.mxu0 0
    %346 = vmatpush1.bf16.msra.mxu0 %v312
    %347 = vmatprep.subr.bf16.mxu0 0
    %348 = vmatpush1.bf16.msra.mxu0 %v313
    %349 = vmatprep.subr.bf16.mxu0 0
    %350 = vmatpush1.bf16.msra.mxu0 %v314
    %351 = vmatprep.subr.bf16.mxu0 0
    %352 = vmatpush1.bf16.msra.mxu0 0
    %353 = vmatprep.subr.bf16.mxu0 0
    %354 = vmatpush1.bf16.msra.mxu0 0
    %355 = vmatprep.subr.bf16.mxu0 0
    %356 = vmatpush1.bf16.msra.mxu0 0
    %357 = vmatprep.subr.bf16.mxu0 0
    %358 = vmatpush1.bf16.msra.mxu0 0
    %359 = vmatprep.subr.bf16.mxu0 0
    %360 = vmatpush1.bf16.msra.mxu0 0
    %361 = vmatprep.subr.bf16.mxu0 0
    %362 = vmatpush1.bf16.msra.mxu0 0
    %363 = vmatprep.subr.bf16.mxu0 0
    %364 = vmatpush1.bf16.msra.mxu0 0
    %365 = vmatprep.subr.bf16.mxu0 0
    %366 = vmatpush1.bf16.msra.mxu0 0
    %367 = vmatprep.subr.bf16.mxu0 0
    %368 = vmatpush1.bf16.msra.mxu0 0
    %369 = vmatprep.subr.bf16.mxu0 0
    %370 = vmatpush1.bf16.msra.mxu0 0
    %371 = vmatprep.subr.bf16.mxu0 0
    %372 = vmatpush1.bf16.msra.mxu0 0
    %373 = vmatprep.subr.bf16.mxu0 0
    %374 = vmatpush1.bf16.msra.mxu0 0
    %375 = vmatprep.mubr.bf16.mxu0 0
    %376 = vmatmul.mubr.bf16.gmra.mrb[0].mxu0 %v320
    %v377 = vpop.f32.mrb[0].mxu0
    %v378 = vadd.f32 %v293, %v377
    %v379 = vpop.f32.mrb[0].mxu0
    %v380 = vpop.f32.mrb[0].mxu0
    %v381 = vadd.f32 %v293, %v380
    %v382 = vpop.f32.mrb[0].mxu0
    %383 = vmatprep.mubr.bf16.mxu0 0
    %384 = vmatmul.mubr.bf16.gmra.mrb[0].mxu0 %v323
    %v385 = vpop.f32.mrb[0].mxu0
    %v386 = vadd.f32 %v293, %v385
    %v387 = vpop.f32.mrb[0].mxu0
    %v388 = vpop.f32.mrb[0].mxu0
    %v389 = vadd.f32 %v293, %v388
    %v390 = vpop.f32.mrb[0].mxu0
    %391 = vmatprep.mubr.bf16.mxu0 0
    %392 = vmatmul.mubr.bf16.gmra.mrb[0].mxu0 %v326
    %v393 = vpop.f32.mrb[0].mxu0
    %v394 = vadd.f32 %v293, %v393
    %v395 = vpop.f32.mrb[0].mxu0
    %v396 = vpop.f32.mrb[0].mxu0
    %v397 = vadd.f32 %v293, %v396
    %v398 = vpop.f32.mrb[0].mxu0
    %399 = vmatprep.mubr.bf16.mxu0 0
    %400 = vmatmul.mubr.bf16.gmra.mrb[0].mxu0 %v329
    %v401 = vpop.f32.mrb[0].mxu0
    %v402 = vadd.f32 %v293, %v401
    %v403 = vpop.f32.mrb[0].mxu0
    %v404 = vpop.f32.mrb[0].mxu0
    %v405 = vadd.f32 %v293, %v404
    %v406 = vpop.f32.mrb[0].mxu0
    %407 = vmatprep.mubr.bf16.mxu0 0
    %408 = vmatmul.mubr.bf16.gmra.mrb[0].mxu0 %v332
    %v409 = vpop.f32.mrb[0].mxu0
    %v410 = vadd.f32 %v293, %v409
    %v411 = vpop.f32.mrb[0].mxu0
    %v412 = vpop.f32.mrb[0].mxu0
    %v413 = vadd.f32 %v293, %v412
    %v414 = vpop.f32.mrb[0].mxu0
    %415 = vmatprep.mubr.bf16.mxu0 0
    %416 = vmatmul.mubr.bf16.gmra.mrb[0].mxu0 %v335
    %v417 = vpop.f32.mrb[0].mxu0
    %v418 = vadd.f32 %v293, %v417
    %v419 = vpop.f32.mrb[0].mxu0
    %v420 = vpop.f32.mrb[0].mxu0
    %v421 = vadd.f32 %v293, %v420
    %v422 = vpop.f32.mrb[0].mxu0
    %423 = vmatprep.mubr.bf16.mxu0 0
    %424 = vmatmul.mubr.bf16.gmra.mrb[0].mxu0 %v338
    %v425 = vpop.f32.mrb[0].mxu0
    %v426 = vadd.f32 %v293, %v425
    %v427 = vpop.f32.mrb[0].mxu0
    %v428 = vpop.f32.mrb[0].mxu0
    %v429 = vadd.f32 %v293, %v428
    %v430 = vpop.f32.mrb[0].mxu0
    %431 = vmatprep.mubr.bf16.mxu0 0
    %432 = vmatmul.mubr.bf16.gmra.mrb[0].mxu0 %v341
    %v433 = vpop.f32.mrb[0].mxu0
    %v434 = vadd.f32 %v293, %v433
    %v435 = vpop.f32.mrb[0].mxu0
    %v436 = vpop.f32.mrb[0].mxu0
    %v437 = vadd.f32 %v293, %v436
    %v438 = vpop.f32.mrb[0].mxu0
    %439 = vdwg.mxu0
    %v440 = vmax.f32 %v378, 0.0
    %v441 = vmax.f32 %v381, 0.0
    %v442 = vmax.f32 %v386, 0.0
    %v443 = vmax.f32 %v389, 0.0
    %v444 = vmax.f32 %v394, 0.0
    %v445 = vmax.f32 %v397, 0.0
    %v446 = vmax.f32 %v402, 0.0
    %v447 = vmax.f32 %v405, 0.0
    %v448 = vmax.f32 %v410, 0.0
    %v449 = vmax.f32 %v413, 0.0
    %v450 = vmax.f32 %v418, 0.0
    %v451 = vmax.f32 %v421, 0.0
    %v452 = vmax.f32 %v426, 0.0
    %v453 = vmax.f32 %v429, 0.0
    %v454 = vmax.f32 %v434, 0.0
    %v455 = vmax.f32 %v437, 0.0
    %v456 = vpack.c.bf16 %v441, %v440
    %v457 = vpack.c.bf16 %v443, %v442
    %v458 = vpack.c.bf16 %v445, %v444
    %v459 = vpack.c.bf16 %v447, %v446
    %v460 = vpack.c.bf16 %v449, %v448
    %v461 = vpack.c.bf16 %v451, %v450
    %v462 = vpack.c.bf16 %v453, %v452
    %v463 = vpack.c.bf16 %v455, %v454
    %v464 = vld [vmem:[%s5] sm:$0x1]
    %v465 = vld [vmem:[#allocation2] sm:$0x1]
    %467 = vset.pattern.permute.xlu0 0
    %468 = vperm.xlu0 %467, %v465
    %v469 = vpop.permute.xlu0 %468
    %v471 = vlaneseq
    %v472 = vshrl.u32 %v471, 7
    %v473 = vsub.s32 0, %v472
    %v474 = vrot.slane %v469, %v473
    %v476 = vsel %vm134, %v464, 0
    %v479 = vsel %vm134, %v456, 0
    %v482 = vsel %vm134, %v457, 0
    %v485 = vsel %vm134, %v458, 0
    %v488 = vsel %vm134, %v459, 0
    %v491 = vsel %vm134, %v460, 0
    %v494 = vsel %vm134, %v461, 0
    %v497 = vsel %vm134, %v462, 0
    %v500 = vsel %vm134, %v463, 0
    %502 = vmatprep.subr.bf16.mxu0 0
    %503 = vmatpush1.bf16.xpose.msra.mxu0 %v479
    %504 = vmatprep.subr.bf16.mxu0 0
    %505 = vmatpush1.bf16.xpose.msra.mxu0 %v482
    %506 = vmatprep.subr.bf16.mxu0 0
    %507 = vmatpush1.bf16.xpose.msra.mxu0 %v485
    %508 = vmatprep.subr.bf16.mxu0 0
    %509 = vmatpush1.bf16.xpose.msra.mxu0 %v488
    %510 = vmatprep.subr.bf16.mxu0 0
    %511 = vmatpush1.bf16.xpose.msra.mxu0 %v491
    %512 = vmatprep.subr.bf16.mxu0 0
    %513 = vmatpush1.bf16.xpose.msra.mxu0 %v494
    %514 = vmatprep.subr.bf16.mxu0 0
    %515 = vmatpush1.bf16.xpose.msra.mxu0 %v497
    %516 = vmatprep.subr.bf16.mxu0 0
    %517 = vmatpush1.bf16.xpose.msra.mxu0 %v500
    %518 = vmatprep.subr.bf16.mxu0 0
    %519 = vmatpush1.bf16.xpose.msra.mxu0 0
    %520 = vmatprep.subr.bf16.mxu0 0
    %521 = vmatpush1.bf16.xpose.msra.mxu0 0
    %522 = vmatprep.subr.bf16.mxu0 0
    %523 = vmatpush1.bf16.xpose.msra.mxu0 0
    %524 = vmatprep.subr.bf16.mxu0 0
    %525 = vmatpush1.bf16.xpose.msra.mxu0 0
    %526 = vmatprep.subr.bf16.mxu0 0
    %527 = vmatpush1.bf16.xpose.msra.mxu0 0
    %528 = vmatprep.subr.bf16.mxu0 0
    %529 = vmatpush1.bf16.xpose.msra.mxu0 0
    %530 = vmatprep.subr.bf16.mxu0 0
    %531 = vmatpush1.bf16.xpose.msra.mxu0 0
    %532 = vmatprep.subr.bf16.mxu0 0
    %533 = vmatpush1.bf16.xpose.msra.mxu0 0
    %534 = vmatprep.mubr.bf16.mxu0 0
    %535 = vmatmul.mubr.bf16.gmra.mrb[0].mxu0 %v476
    %v536 = vpop.f32.mrb[0].mxu0
    %v537 = vadd.f32 %v474, %v536
    %v538 = vpop.f32.mrb[0].mxu0
    %v539 = vpop.f32.mrb[0].mxu0
    %v540 = vpop.f32.mrb[0].mxu0
    %541 = vdwg.mxu0
    %542 = vst [vmem:[#allocation9] sm:$0x1] %v537
    // Predicated region
    $region42: #{tpu_custom_call.1} parent=1 // pred_check
      _
    $region43: #{tpu_custom_call.1} parent=1 // pred_check_branch
      %544 = sbr.rel (0) target = $region45
    $region44: #{tpu_custom_call.1} parent=1 // pred_region
      %s546 = ssub.s32 16, 16
      %547 = vsyncadd [#allocation5], %s546
      %s549 = sshll.u32 [#allocation9], 4
      %s550 = int_to_ptr.vmem [resolvable:$true] %s549
      %552 = dma.vmem_to_hbm [thread:$0]  %s550, 16, %s7, [#allocation5]
    $region45: #{tpu_custom_call.1} parent=1 // pred_fallthru
      _
    // Predicated region
    $region46: #{tpu_custom_call.1} parent=1 // pred_check
      _
    $region47: #{tpu_custom_call.1} parent=1 // pred_check_branch
      %554 = sbr.rel (0) target = $region49
    $region48: #{tpu_custom_call.1} parent=1 // pred_region
      %555 = dma.done [#allocation5], 16
    $region49: #{tpu_custom_call.1} parent=1 // pred_fallthru
      _
    %556 = vsyncpa [#allocation4], 1
    %557 = vsyncpa [#allocation7], 1
    %558 = vsyncpa [#allocation5], 1

</llo_original>
